<compile_context>
chip_gen: v7x
topology: tpu7x:2x2x1
jax: 0.10.0
libtpu: 0.0.40
codegen_flags: <defaults>
</compile_context>

<pallas_src>
import functools

import jax
import jax.numpy as jnp
import numpy as np
from jax import lax
from jax.experimental import pallas as pl
from jax.experimental.pallas import tpu as pltpu

LRELU_SLOPE = 0.1

_VMEM_LIMIT_BYTES = 48 * 1024 * 1024     # explicit, with headroom below v7x 64 MiB/TC
_BLOCK_BUDGET_BYTES = 26 * 1024 * 1024   # double-buffered per-step block budget
_MAX_TILE_ROWS = 1024


def _round_up(x, m):
    return ((x + m - 1) // m) * m


# ----------------------------------------------------------------------------
# Pallas kernels
# ----------------------------------------------------------------------------
def _gconv_matmul_kernel(x_ref, w_ref, b_ref, o_ref, *, gpb, apply_relu):
    """One grid step: `gpb` per-group matmuls (taps folded into contraction),
    fused bias + leaky_relu, single lane-dense store of the (rows, gpb*Cout_g)
    output slab."""
    outs = []
    for j in range(gpb):                       # static unroll over groups-in-block
        outs.append(jnp.dot(x_ref[j], w_ref[j],
                            preferred_element_type=jnp.float32))
    y = outs[0] if gpb == 1 else jnp.concatenate(outs, axis=-1)
    y = y + b_ref[0]                           # (rows, W) + (1, W)
    if apply_relu:
        y = jnp.where(y >= 0, y, LRELU_SLOPE * y)
    o_ref[...] = y.astype(o_ref.dtype)


def _conv_cout1_kernel(x_ref, w_ref, b_ref, o_ref, *, apply_relu):
    """Cout == 1 path (conv_post / mean-pool): VPU multiply + lane reduction,
    avoiding a 1-wide MXU matmul.
    TODO(synk): repack rows onto lanes for a fully lane-dense Cout=1 store."""
    x = x_ref[...].astype(jnp.float32)         # (rows, K*Cin)
    w = w_ref[...].astype(jnp.float32)         # (1, K*Cin)
    y = jnp.sum(x * w, axis=-1, keepdims=True) + b_ref[...]
    if apply_relu:
        y = jnp.where(y >= 0, y, LRELU_SLOPE * y)
    o_ref[...] = y.astype(o_ref.dtype)


# ----------------------------------------------------------------------------
# Tiling heuristics
# ----------------------------------------------------------------------------
def _choose_gpb(groups, cout_g):
    """Smallest divisor of `groups` whose output slab is lane-dense
    (>=128 and a multiple of 128); else all groups (full-Cout slab)."""
    for gpb in range(1, groups + 1):
        if groups % gpb:
            continue
        w = gpb * cout_g
        if w >= 128 and w % 128 == 0:
            return gpb
    return groups


def _choose_tile_rows(bt, gpb, kc, out_w, w_block_bytes):
    """Largest row tile (multiple of 8) fitting the double-buffered VMEM budget."""
    per_row = 2 * (gpb * kc * 2 + out_w * 4)   # bf16 x block + f32 out block, 2x buffered
    avail = _BLOCK_BUDGET_BYTES - 2 * w_block_bytes
    tr = max(avail // max(per_row, 1), 8)
    tr = min(tr, _MAX_TILE_ROWS, _round_up(bt, 8))
    return max((tr // 8) * 8, 8)


# ----------------------------------------------------------------------------
# Grouped 1-D conv (cross-correlation) + bias (+ leaky relu)
# ----------------------------------------------------------------------------
def conv1d_grouped(x, w, b, *, stride, padding, groups, apply_relu):
    """Grouped Conv1d matching torch.nn.Conv1d semantics.

    x: (B, T, Cin) f32 channels-last
    w: (Cout, Cin//groups, K) f32  (PyTorch Conv1d weight layout)
    b: (Cout,) f32
    returns: (B, T_out, Cout) f32
    """
    B, T, Cin = x.shape
    Cout, Cin_g, K = w.shape
    G = groups
    assert Cin == Cin_g * G and Cout % G == 0
    Cout_g = Cout // G
    T_out = (T + 2 * padding - K) // stride + 1
    BT = B * T_out
    KC = K * Cin_g

    # Glue: zero-pad + im2col taps in bf16 (taps folded into contraction dim).
    x_bf = x.astype(jnp.bfloat16)
    x_pad = jnp.pad(x_bf, ((0, 0), (padding, padding), (0, 0)))
    taps = jnp.stack(
        [x_pad[:, k: k + stride * (T_out - 1) + 1: stride, :] for k in range(K)],
        axis=0,
    )                                                     # (K, B, T_out, Cin)
    w_bf = w.astype(jnp.bfloat16)

    # ---------------- Cout == 1: VPU reduce path ----------------
    if Cout == 1 and G == 1:
        x_col = taps.transpose(1, 2, 0, 3).reshape(BT, KC)           # (BT, K*Cin)
        w_r = w_bf.reshape(1, Cin_g, K).transpose(0, 2, 1).reshape(1, KC)
        tr = _choose_tile_rows(BT, 1, KC, 1, KC * 2)
        BT_pad = _round_up(max(BT, tr), tr)
        x_col = jnp.pad(x_col, ((0, BT_pad - BT), (0, 0)))

        out = pl.pallas_call(
            functools.partial(_conv_cout1_kernel, apply_relu=apply_relu),
            out_shape=jax.ShapeDtypeStruct((BT_pad, 1), jnp.float32),
            grid_spec=pltpu.PrefetchScalarGridSpec(
                num_scalar_prefetch=0,
                grid=(BT_pad // tr,),
                in_specs=[
                    pl.BlockSpec((tr, KC), lambda r: (r, 0)),
                    pl.BlockSpec((1, KC), lambda r: (0, 0)),
                    pl.BlockSpec((1, 1), lambda r: (0, 0)),
                ],
                out_specs=pl.BlockSpec((tr, 1), lambda r: (r, 0)),
            ),
            compiler_params=pltpu.CompilerParams(
                dimension_semantics=("parallel",),
                vmem_limit_bytes=_VMEM_LIMIT_BYTES),
        )(x_col, w_r, b.astype(jnp.float32).reshape(1, 1))
        return out[:BT].reshape(B, T_out, Cout)

    # ---------------- grouped matmul path ----------------
    gpb = _choose_gpb(G, Cout_g)          # groups processed per grid step
    out_w = gpb * Cout_g                  # lane-dense output slab width

    # (K,B,T_out,G,Cin_g) -> (G, BT, K*Cin_g); contraction order (k, ci)
    x_col = (taps.reshape(K, B, T_out, G, Cin_g)
             .transpose(3, 1, 2, 0, 4)
             .reshape(G, BT, KC))
    w_r = (w_bf.reshape(G, Cout_g, Cin_g, K)
           .transpose(0, 3, 2, 1)
           .reshape(G, KC, Cout_g))
    b_r = b.astype(jnp.float32).reshape(G // gpb, 1, out_w)

    w_block_bytes = gpb * KC * Cout_g * 2
    tr = _choose_tile_rows(BT, gpb, KC, out_w, w_block_bytes)
    BT_pad = _round_up(max(BT, tr), tr)
    x_col = jnp.pad(x_col, ((0, 0), (0, BT_pad - BT), (0, 0)))

    out = pl.pallas_call(
        functools.partial(_gconv_matmul_kernel, gpb=gpb, apply_relu=apply_relu),
        out_shape=jax.ShapeDtypeStruct((BT_pad, Cout), jnp.float32),
        grid_spec=pltpu.PrefetchScalarGridSpec(
            num_scalar_prefetch=0,
            grid=(G // gpb, BT_pad // tr),     # (group_blocks, row_tiles), no reduction axis
            in_specs=[
                pl.BlockSpec((gpb, tr, KC), lambda g, r: (g, r, 0)),
                pl.BlockSpec((gpb, KC, Cout_g), lambda g, r: (g, 0, 0)),
                pl.BlockSpec((1, 1, out_w), lambda g, r: (g, 0, 0)),
            ],
            out_specs=pl.BlockSpec((tr, out_w), lambda g, r: (r, g)),
        ),
        compiler_params=pltpu.CompilerParams(
            dimension_semantics=("parallel", "parallel"),
            vmem_limit_bytes=_VMEM_LIMIT_BYTES),
    )(x_col, w_r, b_r)

    return out[:BT].reshape(B, T_out, Cout)


# ----------------------------------------------------------------------------
# Pure-JAX reference conv (same bf16-input / f32-accumulate numerics)
# ----------------------------------------------------------------------------
def _conv_ref(x, w, b, *, stride, padding, groups, apply_relu):
    w_wio = jnp.transpose(w.astype(jnp.bfloat16), (2, 1, 0))  # (K, Cin_g, Cout)
    out = lax.conv_general_dilated(
        x.astype(jnp.bfloat16), w_wio, window_strides=(stride,),
        padding=[(padding, padding)],
        dimension_numbers=("NWC", "WIO", "NWC"),
        feature_group_count=groups,
        preferred_element_type=jnp.float32)
    out = out + b[None, None, :].astype(jnp.float32)
    if apply_relu:
        out = jnp.where(out >= 0, out, LRELU_SLOPE * out)
    return out


# ----------------------------------------------------------------------------
# DiscriminatorS / MultiScaleDiscriminator forward
# ----------------------------------------------------------------------------
# (cin, cout, kernel, stride, groups, padding, leaky_relu)
LAYER_SPECS = [
    (1, 128, 15, 1, 1, 7, True),        # padding='same'
    (128, 128, 41, 2, 4, 20, True),
    (128, 256, 41, 2, 16, 20, True),
    (256, 512, 41, 4, 16, 20, True),
    (512, 1024, 41, 4, 16, 20, True),
    (1024, 1024, 41, 1, 16, 20, True),  # padding='same'
    (1024, 1024, 5, 1, 1, 2, True),     # padding='same'
    (1024, 1, 3, 1, 1, 1, False),       # conv_post, padding='same', no relu
]


def init_discriminator_params(key):
    params = []
    for (cin, cout, k, _s, g, _p, _r) in LAYER_SPECS:
        key, kw, kb = jax.random.split(key, 3)
        w = jax.random.normal(kw, (cout, cin // g, k), jnp.float32) * 0.02
        b = jax.random.normal(kb, (cout,), jnp.float32) * 0.01
        params.append((w, b))
    return params


def discriminator_s_forward(params, x_cl, conv_fn):
    """x_cl: (N, T, 1) channels-last. Returns (score (N, L), fmap list in NCW)."""
    fmap = []
    h = x_cl
    for (w, b), (_ci, _co, _k, s, g, p, relu) in zip(params, LAYER_SPECS):
        h = conv_fn(h, w, b, stride=s, padding=p, groups=g, apply_relu=relu)
        fmap.append(jnp.transpose(h, (0, 2, 1)))  # NCW, matching PyTorch fmap entries
    score = fmap[-1].reshape(h.shape[0], -1)      # torch.flatten(x, 1, -1)
    return score, fmap


def multi_scale_discriminator_forward(all_params, y, y_hat, conv_fn=conv1d_grouped):
    """y, y_hat: (B, 1, T) in PyTorch NCW layout."""
    B = y.shape[0]
    # Batch real + generated along the batch dim (halves launches, doubles M).
    sig_cl = jnp.transpose(jnp.concatenate([y, y_hat], axis=0), (0, 2, 1))  # (2B,T,1)

    # AvgPool1d(4, 2, padding=2) with count_include_pad=True == conv with weight 1/4.
    pool_w = jnp.full((1, 1, 4), 0.25, jnp.float32)
    pool_b = jnp.zeros((1,), jnp.float32)

    y_d_rs, y_d_gs, fmap_rs, fmap_gs = [], [], [], []
    for i, params in enumerate(all_params):
        if i != 0:
            sig_cl = conv_fn(sig_cl, pool_w, pool_b, stride=2, padding=2, groups=1,
                             apply_relu=False)
        score, fmap = discriminator_s_forward(params, sig_cl, conv_fn)
        y_d_rs.append(score[:B])
        y_d_gs.append(score[B:])
        fmap_rs.append([f[:B] for f in fmap])
        fmap_gs.append([f[B:] for f in fmap])
    return y_d_rs, y_d_gs, fmap_rs, fmap_gs


if __name__ == "__main__":
    key = jax.random.PRNGKey(0)
    k_p, k_y, k_g = jax.random.split(key, 3)

    B, T = 2, 64  # small synthetic audio length
    y = jax.random.normal(k_y, (B, 1, T), jnp.float32)
    y_hat = jax.random.normal(k_g, (B, 1, T), jnp.float32)

    all_params = [init_discriminator_params(k) for k in jax.random.split(k_p, 3)]

    out = multi_scale_discriminator_forward(all_params, y, y_hat,
                                            conv_fn=conv1d_grouped)
    out = jax.block_until_ready(out)

    ref = multi_scale_discriminator_forward(all_params, y, y_hat,
                                            conv_fn=_conv_ref)
    ref = jax.block_until_ready(ref)

    for a, r in zip(jax.tree_util.tree_leaves(out), jax.tree_util.tree_leaves(ref)):
        np.testing.assert_allclose(np.asarray(a), np.asarray(r),
                                   rtol=1e-2, atol=2e-4)

    print("KERNEL_OK")
</pallas_src>

<mosaic_0001>
module attributes {stable_mosaic.version = 11 : i64} {
  func.func @_gconv_matmul_kernel(%arg0: i32, %arg1: i32, %arg2: memref<1x256x15xbf16, #tpu.memory_space<vmem>>, %arg3: memref<1x15x128xbf16, #tpu.memory_space<vmem>>, %arg4: memref<1x1x128xf32, #tpu.memory_space<vmem>>, %arg5: memref<256x128xf32, #tpu.memory_space<vmem>>) attributes {dimension_semantics = [#tpu.dimension_semantics<parallel>, #tpu.dimension_semantics<parallel>], iteration_bounds = array<i64: 1, 1>, scalar_prefetch = 0 : i64, scratch_operands = 0 : i64, tpu.core_type = #tpu.core_type<tc>, window_params = [{transform_indices = @transform_0, window_bounds = array<i64: 1, 256, 15>}, {transform_indices = @transform_1, window_bounds = array<i64: 1, 15, 128>}, {transform_indices = @transform_2, window_bounds = array<i64: 1, 1, 128>}, {transform_indices = @transform_3, window_bounds = array<i64: 256, 128>}]} {
    %c0 = arith.constant 0 : index
    %c0_0 = arith.constant 0 : index
    %c0_1 = arith.constant 0 : index
    %0 = vector.load %arg2[%c0, %c0_0, %c0_1] : memref<1x256x15xbf16, #tpu.memory_space<vmem>>, vector<1x256x15xbf16>
    %1 = vector.shape_cast %0 : vector<1x256x15xbf16> to vector<256x15xbf16>
    %c0_2 = arith.constant 0 : index
    %c0_3 = arith.constant 0 : index
    %c0_4 = arith.constant 0 : index
    %2 = vector.load %arg3[%c0_2, %c0_3, %c0_4] : memref<1x15x128xbf16, #tpu.memory_space<vmem>>, vector<1x15x128xbf16>
    %3 = vector.shape_cast %2 : vector<1x15x128xbf16> to vector<15x128xbf16>
    %cst = arith.constant dense<0.000000e+00> : vector<256x128xf32>
    %4 = tpu.matmul %1, %3, %cst {dimension_numbers = #tpu.dot_dimension_numbers<[1], [0], [0], [1], [0, 0, 1, 1], [], []>} : vector<256x15xbf16>, vector<15x128xbf16>, vector<256x128xf32> -> vector<256x128xf32>
    %c0_5 = arith.constant 0 : index
    %c0_6 = arith.constant 0 : index
    %c0_7 = arith.constant 0 : index
    %5 = vector.load %arg4[%c0_5, %c0_6, %c0_7] : memref<1x1x128xf32, #tpu.memory_space<vmem>>, vector<1x1x128xf32>
    %6 = vector.shape_cast %5 : vector<1x1x128xf32> to vector<1x128xf32>
    %7 = vector.broadcast %6 : vector<1x128xf32> to vector<256x128xf32>
    %8 = arith.addf %4, %7 : vector<256x128xf32>
    %cst_8 = arith.constant 0.000000e+00 : f32
    %9 = vector.broadcast %cst_8 : f32 to vector<256x128xf32>
    %10 = arith.cmpf oge, %8, %9 : vector<256x128xf32>
    %cst_9 = arith.constant 1.000000e-01 : f32
    %11 = vector.broadcast %cst_9 : f32 to vector<256x128xf32>
    %12 = arith.mulf %11, %8 : vector<256x128xf32>
    %13 = arith.select %10, %8, %12 : vector<256x128xi1>, vector<256x128xf32>
    %c0_10 = arith.constant 0 : index
    %c0_11 = arith.constant 0 : index
    %14 = vector.load %arg5[%c0_10, %c0_11] : memref<256x128xf32, #tpu.memory_space<vmem>>, vector<256x128xf32>
    tpu.vector_store %arg5[%c0_10, %c0_11], %13 {strides = array<i32>} : memref<256x128xf32, #tpu.memory_space<vmem>>, vector<256x128xf32>,
    return
  }
  func.func @transform_0(%arg0: i32, %arg1: i32) -> (i32, i32, i32) {
    %c0_i32 = arith.constant 0 : i32
    %c0_i32_0 = arith.constant 0 : i32
    return %arg0, %arg1, %c0_i32 : i32, i32, i32
  }
  func.func @transform_1(%arg0: i32, %arg1: i32) -> (i32, i32, i32) {
    %c0_i32 = arith.constant 0 : i32
    %c0_i32_0 = arith.constant 0 : i32
    %c0_i32_1 = arith.constant 0 : i32
    return %arg0, %c0_i32, %c0_i32_0 : i32, i32, i32
  }
  func.func @transform_2(%arg0: i32, %arg1: i32) -> (i32, i32, i32) {
    %c0_i32 = arith.constant 0 : i32
    %c0_i32_0 = arith.constant 0 : i32
    %c0_i32_1 = arith.constant 0 : i32
    return %arg0, %c0_i32, %c0_i32_0 : i32, i32, i32
  }
  func.func @transform_3(%arg0: i32, %arg1: i32) -> (i32, i32) {
    %c0_i32 = arith.constant 0 : i32
    return %arg1, %arg0 : i32, i32
  }
}

</mosaic_0001>

<llo_original>
// kernel: tpu_custom_call.1
$region0: #{tpu_custom_call.1}
  #allocation0 [shape = 'u32[]', space=smem, size = 0x4, offset = 0x4, fixed_abs, tag = 'smem constant byte address 0x4 - core index']
  #allocation1 [shape = 'u32[144,128]{1,0:T(1,128)}', space=vmem, size = 0x12000, scoped, tag = 'internal scratch']
  %s0 = inlined_call_operand.vmem [shape: bf16[1,256,15], index: 0, kind: input, shape index: {}]
  %s1 = inlined_call_operand.vmem [shape: bf16[1,15,128], index: 1, kind: input, shape index: {}]
  %s2 = inlined_call_operand.vmem [shape: f32[1,1,128], index: 2, kind: input, shape index: {}]
  %s3 = inlined_call_operand.hbm [shape: f32[256,128], index: 3, kind: output, shape index: {}]
  %s4 = sld [smem:[#allocation0]]
  $region22: #{tpu_custom_call.1} parent=0
    _
  %s6 = ssub.s32 1, %s4
  %s7 = scalar_select 0, %s6, %s4
  $region1: #{tpu_custom_call.1} parent=0
    #allocation2 [shape = 'u8[131072]{0}', space=vmem, size = 0x20000, scoped, tag = 'output window, operand 0, single buffered']
    #allocation3 [shape = 's32[1]{0}', space=sflag, size = 0x4, scoped, tag = 'scoped memory for tpu_custom_call.1']
    %8 = vsyncpa [#allocation3], 0
    // Predicated region
    $region2: #{tpu_custom_call.1} parent=1 // pred_check
      _
    $region3: #{tpu_custom_call.1} parent=1 // pred_check_branch
      %10 = sbr.rel (0) target = $region5
    $region4: #{tpu_custom_call.1} parent=1 // pred_region
      _
    $region5: #{tpu_custom_call.1} parent=1 // pred_fallthru
      _
    // Predicated region
    $region6: #{tpu_custom_call.1} parent=1 // pred_check
      _
    $region7: #{tpu_custom_call.1} parent=1 // pred_check_branch
      %12 = sbr.rel (0) target = $region9
    $region8: #{tpu_custom_call.1} parent=1 // pred_region
      _
    $region9: #{tpu_custom_call.1} parent=1 // pred_fallthru
      _
    // Predicated region
    $region10: #{tpu_custom_call.1} parent=1 // pred_check
      _
    $region11: #{tpu_custom_call.1} parent=1 // pred_check_branch
      %14 = sbr.rel (0) target = $region13
    $region12: #{tpu_custom_call.1} parent=1 // pred_region
      _
    $region13: #{tpu_custom_call.1} parent=1 // pred_fallthru
      _
    %v16 = vld [vmem:[%s0] sm:$0xf]
    %v17 = vld [vmem:[%s0 + $0x4] sm:$0xf]
    %v18 = vld [vmem:[%s0 + $0x8] sm:$0xf]
    %v19 = vld [vmem:[%s0 + $0xc] sm:$0xf]
    %v20 = vld [vmem:[%s0 + $0x10] sm:$0xf]
    %v21 = vld [vmem:[%s0 + $0x14] sm:$0xf]
    %v22 = vld [vmem:[%s0 + $0x18] sm:$0xf]
    %v23 = vld [vmem:[%s0 + $0x1c] sm:$0xf]
    %v24 = vld [vmem:[%s0 + $0x20] sm:$0xf]
    %v25 = vld [vmem:[%s0 + $0x24] sm:$0xf]
    %v26 = vld [vmem:[%s0 + $0x28] sm:$0xf]
    %v27 = vld [vmem:[%s0 + $0x2c] sm:$0xf]
    %v28 = vld [vmem:[%s0 + $0x30] sm:$0xf]
    %v29 = vld [vmem:[%s0 + $0x34] sm:$0xf]
    %v30 = vld [vmem:[%s0 + $0x38] sm:$0xf]
    %v31 = vld [vmem:[%s0 + $0x3c] sm:$0xf]
    %v32 = vld [vmem:[%s0 + $0x40] sm:$0xf]
    %v33 = vld [vmem:[%s0 + $0x44] sm:$0xf]
    %v34 = vld [vmem:[%s0 + $0x48] sm:$0xf]
    %v35 = vld [vmem:[%s0 + $0x4c] sm:$0xf]
    %v36 = vld [vmem:[%s0 + $0x50] sm:$0xf]
    %v37 = vld [vmem:[%s0 + $0x54] sm:$0xf]
    %v38 = vld [vmem:[%s0 + $0x58] sm:$0xf]
    %v39 = vld [vmem:[%s0 + $0x5c] sm:$0xf]
    %v40 = vld [vmem:[%s0 + $0x60] sm:$0xf]
    %v41 = vld [vmem:[%s0 + $0x64] sm:$0xf]
    %v42 = vld [vmem:[%s0 + $0x68] sm:$0xf]
    %v43 = vld [vmem:[%s0 + $0x6c] sm:$0xf]
    %v44 = vld [vmem:[%s0 + $0x70] sm:$0xf]
    %v45 = vld [vmem:[%s0 + $0x74] sm:$0xf]
    %v46 = vld [vmem:[%s0 + $0x78] sm:$0xf]
    %v47 = vld [vmem:[%s0 + $0x7c] sm:$0xf]
    %v48 = vld [vmem:[%s1] sm:$0xf]
    %v49 = vld [vmem:[%s1 + $0x4] sm:$0xf]
    %v50 = vld [vmem:[%s2] sm:$0x1]
    %v52 = vlaneseq
    %v53 = vshrl.u32 %v52, 7
    %v54 = vsub.s32 0, %v53
    %v55 = vrot.slane %v50, %v54
    %v89 = vunpack.c.l.b16 %v16
    %v90 = vunpack.c.l.b16 %v17
    %v91 = vunpack.c.l.b16 %v18
    %v92 = vunpack.c.l.b16 %v19
    %v93 = vunpack.c.l.b16 %v20
    %v94 = vunpack.c.l.b16 %v21
    %v95 = vunpack.c.l.b16 %v22
    %v96 = vunpack.c.l.b16 %v23
    %v97 = vunpack.c.l.b16 %v24
    %v98 = vunpack.c.l.b16 %v25
    %v99 = vunpack.c.l.b16 %v26
    %v100 = vunpack.c.l.b16 %v27
    %v101 = vunpack.c.l.b16 %v28
    %v102 = vunpack.c.l.b16 %v29
    %v103 = vunpack.c.l.b16 %v30
    %v104 = vunpack.c.l.b16 %v31
    %v105 = vunpack.c.l.b16 %v32
    %v106 = vunpack.c.l.b16 %v33
    %v107 = vunpack.c.l.b16 %v34
    %v108 = vunpack.c.l.b16 %v35
    %v109 = vunpack.c.l.b16 %v36
    %v110 = vunpack.c.l.b16 %v37
    %v111 = vunpack.c.l.b16 %v38
    %v112 = vunpack.c.l.b16 %v39
    %v113 = vunpack.c.l.b16 %v40
    %v114 = vunpack.c.l.b16 %v41
    %v115 = vunpack.c.l.b16 %v42
    %v116 = vunpack.c.l.b16 %v43
    %v117 = vunpack.c.l.b16 %v44
    %v118 = vunpack.c.l.b16 %v45
    %v119 = vunpack.c.l.b16 %v46
    %v120 = vunpack.c.l.b16 %v47
    %v121 = vpack.c.b16 %v90, %v89
    %v122 = vpack.c.b16 %v92, %v91
    %v123 = vpack.c.b16 %v94, %v93
    %v124 = vpack.c.b16 %v96, %v95
    %v125 = vpack.c.b16 %v98, %v97
    %v126 = vpack.c.b16 %v100, %v99
    %v127 = vpack.c.b16 %v102, %v101
    %v128 = vpack.c.b16 %v104, %v103
    %v129 = vpack.c.b16 %v106, %v105
    %v130 = vpack.c.b16 %v108, %v107
    %v131 = vpack.c.b16 %v110, %v109
    %v132 = vpack.c.b16 %v112, %v111
    %v133 = vpack.c.b16 %v114, %v113
    %v134 = vpack.c.b16 %v116, %v115
    %v135 = vpack.c.b16 %v118, %v117
    %v136 = vpack.c.b16 %v120, %v119
    %v139 = vunpack.c.l.b16 %v48
    %v140 = vunpack.c.l.b16 %v49
    %v141 = vpack.c.b16 %v140, %v139
    %vm142 = vcmask 121856
    %v144 = vsel %vm142, %v121, 0
    %v147 = vsel %vm142, %v122, 0
    %v150 = vsel %vm142, %v123, 0
    %v153 = vsel %vm142, %v124, 0
    %v156 = vsel %vm142, %v125, 0
    %v159 = vsel %vm142, %v126, 0
    %v162 = vsel %vm142, %v127, 0
    %v165 = vsel %vm142, %v128, 0
    %v168 = vsel %vm142, %v129, 0
    %v171 = vsel %vm142, %v130, 0
    %v174 = vsel %vm142, %v131, 0
    %v177 = vsel %vm142, %v132, 0
    %v180 = vsel %vm142, %v133, 0
    %v183 = vsel %vm142, %v134, 0
    %v186 = vsel %vm142, %v135, 0
    %v189 = vsel %vm142, %v136, 0
    %vm191 = vcmask 1046528
    %vm192 = vcmask 1047552
    %v193 = vsel %vm191, 4294967295, 65535
    %v194 = vsel %vm192, %v193, 0
    %v196 = vand.u32 %v141, %v194
    %198 = vmatprep.subr.bf16.mxu0 0
    %199 = vmatpush1.bf16.msra.mxu0 %v196
    %200 = vmatprep.subr.bf16.mxu0 0
    %201 = vmatpush1.bf16.msra.mxu0 0
    %202 = vmatprep.subr.bf16.mxu0 0
    %203 = vmatpush1.bf16.msra.mxu0 0
    %204 = vmatprep.subr.bf16.mxu0 0
    %205 = vmatpush1.bf16.msra.mxu0 0
    %206 = vmatprep.subr.bf16.mxu0 0
    %207 = vmatpush1.bf16.msra.mxu0 0
    %208 = vmatprep.subr.bf16.mxu0 0
    %209 = vmatpush1.bf16.msra.mxu0 0
    %210 = vmatprep.subr.bf16.mxu0 0
    %211 = vmatpush1.bf16.msra.mxu0 0
    %212 = vmatprep.subr.bf16.mxu0 0
    %213 = vmatpush1.bf16.msra.mxu0 0
    %214 = vmatprep.subr.bf16.mxu0 0
    %215 = vmatpush1.bf16.msra.mxu0 0
    %216 = vmatprep.subr.bf16.mxu0 0
    %217 = vmatpush1.bf16.msra.mxu0 0
    %218 = vmatprep.subr.bf16.mxu0 0
    %219 = vmatpush1.bf16.msra.mxu0 0
    %220 = vmatprep.subr.bf16.mxu0 0
    %221 = vmatpush1.bf16.msra.mxu0 0
    %222 = vmatprep.subr.bf16.mxu0 0
    %223 = vmatpush1.bf16.msra.mxu0 0
    %224 = vmatprep.subr.bf16.mxu0 0
    %225 = vmatpush1.bf16.msra.mxu0 0
    %226 = vmatprep.subr.bf16.mxu0 0
    %227 = vmatpush1.bf16.msra.mxu0 0
    %228 = vmatprep.subr.bf16.mxu0 0
    %229 = vmatpush1.bf16.msra.mxu0 0
    %230 = vmatprep.mubr.bf16.mxu0 0
    %231 = vmatmul.mubr.bf16.gmra.mrb[0].mxu0 %v144
    %v232 = vpop.f32.mrb[0].mxu0
    %v233 = vadd.f32 %v55, %v232
    %v234 = vpop.f32.mrb[0].mxu0
    %v235 = vpop.f32.mrb[0].mxu0
    %v236 = vadd.f32 %v55, %v235
    %v237 = vpop.f32.mrb[0].mxu0
    %238 = vmatprep.mubr.bf16.mxu0 0
    %239 = vmatmul.mubr.bf16.gmra.mrb[0].mxu0 %v147
    %v240 = vpop.f32.mrb[0].mxu0
    %v241 = vadd.f32 %v55, %v240
    %v242 = vpop.f32.mrb[0].mxu0
    %v243 = vpop.f32.mrb[0].mxu0
    %v244 = vadd.f32 %v55, %v243
    %v245 = vpop.f32.mrb[0].mxu0
    %246 = vmatprep.mubr.bf16.mxu0 0
    %247 = vmatmul.mubr.bf16.gmra.mrb[0].mxu0 %v150
    %v248 = vpop.f32.mrb[0].mxu0
    %v249 = vadd.f32 %v55, %v248
    %v250 = vpop.f32.mrb[0].mxu0
    %v251 = vpop.f32.mrb[0].mxu0
    %v252 = vadd.f32 %v55, %v251
    %v253 = vpop.f32.mrb[0].mxu0
    %254 = vmatprep.mubr.bf16.mxu0 0
    %255 = vmatmul.mubr.bf16.gmra.mrb[0].mxu0 %v153
    %v256 = vpop.f32.mrb[0].mxu0
    %v257 = vadd.f32 %v55, %v256
    %v258 = vpop.f32.mrb[0].mxu0
    %v259 = vpop.f32.mrb[0].mxu0
    %v260 = vadd.f32 %v55, %v259
    %v261 = vpop.f32.mrb[0].mxu0
    %262 = vmatprep.mubr.bf16.mxu0 0
    %263 = vmatmul.mubr.bf16.gmra.mrb[0].mxu0 %v156
    %v264 = vpop.f32.mrb[0].mxu0
    %v265 = vadd.f32 %v55, %v264
    %v266 = vpop.f32.mrb[0].mxu0
    %v267 = vpop.f32.mrb[0].mxu0
    %v268 = vadd.f32 %v55, %v267
    %v269 = vpop.f32.mrb[0].mxu0
    %270 = vmatprep.mubr.bf16.mxu0 0
    %271 = vmatmul.mubr.bf16.gmra.mrb[0].mxu0 %v159
    %v272 = vpop.f32.mrb[0].mxu0
    %v273 = vadd.f32 %v55, %v272
    %v274 = vpop.f32.mrb[0].mxu0
    %v275 = vpop.f32.mrb[0].mxu0
    %v276 = vadd.f32 %v55, %v275
    %v277 = vpop.f32.mrb[0].mxu0
    %278 = vmatprep.mubr.bf16.mxu0 0
    %279 = vmatmul.mubr.bf16.gmra.mrb[0].mxu0 %v162
    %v280 = vpop.f32.mrb[0].mxu0
    %v281 = vadd.f32 %v55, %v280
    %v282 = vpop.f32.mrb[0].mxu0
    %v283 = vpop.f32.mrb[0].mxu0
    %v284 = vadd.f32 %v55, %v283
    %v285 = vpop.f32.mrb[0].mxu0
    %286 = vmatprep.mubr.bf16.mxu0 0
    %287 = vmatmul.mubr.bf16.gmra.mrb[0].mxu0 %v165
    %v288 = vpop.f32.mrb[0].mxu0
    %v289 = vadd.f32 %v55, %v288
    %v290 = vpop.f32.mrb[0].mxu0
    %v291 = vpop.f32.mrb[0].mxu0
    %v292 = vadd.f32 %v55, %v291
    %v293 = vpop.f32.mrb[0].mxu0
    %294 = vmatprep.mubr.bf16.mxu0 0
    %295 = vmatmul.mubr.bf16.gmra.mrb[0].mxu0 %v168
    %v296 = vpop.f32.mrb[0].mxu0
    %v297 = vadd.f32 %v55, %v296
    %v298 = vpop.f32.mrb[0].mxu0
    %v299 = vpop.f32.mrb[0].mxu0
    %v300 = vadd.f32 %v55, %v299
    %v301 = vpop.f32.mrb[0].mxu0
    %302 = vmatprep.mubr.bf16.mxu0 0
    %303 = vmatmul.mubr.bf16.gmra.mrb[0].mxu0 %v171
    %v304 = vpop.f32.mrb[0].mxu0
    %v305 = vadd.f32 %v55, %v304
    %v306 = vpop.f32.mrb[0].mxu0
    %v307 = vpop.f32.mrb[0].mxu0
    %v308 = vadd.f32 %v55, %v307
    %v309 = vpop.f32.mrb[0].mxu0
    %310 = vmatprep.mubr.bf16.mxu0 0
    %311 = vmatmul.mubr.bf16.gmra.mrb[0].mxu0 %v174
    %v312 = vpop.f32.mrb[0].mxu0
    %v313 = vadd.f32 %v55, %v312
    %v314 = vpop.f32.mrb[0].mxu0
    %v315 = vpop.f32.mrb[0].mxu0
    %v316 = vadd.f32 %v55, %v315
    %v317 = vpop.f32.mrb[0].mxu0
    %318 = vmatprep.mubr.bf16.mxu0 0
    %319 = vmatmul.mubr.bf16.gmra.mrb[0].mxu0 %v177
    %v320 = vpop.f32.mrb[0].mxu0
    %v321 = vadd.f32 %v55, %v320
    %v322 = vpop.f32.mrb[0].mxu0
    %v323 = vpop.f32.mrb[0].mxu0
    %v324 = vadd.f32 %v55, %v323
    %v325 = vpop.f32.mrb[0].mxu0
    %326 = vmatprep.mubr.bf16.mxu0 0
    %327 = vmatmul.mubr.bf16.gmra.mrb[0].mxu0 %v180
    %v328 = vpop.f32.mrb[0].mxu0
    %v329 = vadd.f32 %v55, %v328
    %v330 = vpop.f32.mrb[0].mxu0
    %v331 = vpop.f32.mrb[0].mxu0
    %v332 = vadd.f32 %v55, %v331
    %v333 = vpop.f32.mrb[0].mxu0
    %334 = vmatprep.mubr.bf16.mxu0 0
    %335 = vmatmul.mubr.bf16.gmra.mrb[0].mxu0 %v183
    %v336 = vpop.f32.mrb[0].mxu0
    %v337 = vadd.f32 %v55, %v336
    %v338 = vpop.f32.mrb[0].mxu0
    %v339 = vpop.f32.mrb[0].mxu0
    %v340 = vadd.f32 %v55, %v339
    %v341 = vpop.f32.mrb[0].mxu0
    %342 = vmatprep.mubr.bf16.mxu0 0
    %343 = vmatmul.mubr.bf16.gmra.mrb[0].mxu0 %v186
    %v344 = vpop.f32.mrb[0].mxu0
    %v345 = vadd.f32 %v55, %v344
    %v346 = vpop.f32.mrb[0].mxu0
    %v347 = vpop.f32.mrb[0].mxu0
    %v348 = vadd.f32 %v55, %v347
    %v349 = vpop.f32.mrb[0].mxu0
    %350 = vmatprep.mubr.bf16.mxu0 0
    %351 = vmatmul.mubr.bf16.gmra.mrb[0].mxu0 %v189
    %v352 = vpop.f32.mrb[0].mxu0
    %v353 = vadd.f32 %v55, %v352
    %v354 = vpop.f32.mrb[0].mxu0
    %v355 = vpop.f32.mrb[0].mxu0
    %v356 = vadd.f32 %v55, %v355
    %v357 = vpop.f32.mrb[0].mxu0
    %358 = vdwg.mxu0
    %vm359 = vcmp.ge.f32.partialorder %v233, 0.0
    %vm360 = vcmp.ge.f32.partialorder %v236, 0.0
    %vm361 = vcmp.ge.f32.partialorder %v241, 0.0
    %vm362 = vcmp.ge.f32.partialorder %v244, 0.0
    %vm363 = vcmp.ge.f32.partialorder %v249, 0.0
    %vm364 = vcmp.ge.f32.partialorder %v252, 0.0
    %vm365 = vcmp.ge.f32.partialorder %v257, 0.0
    %vm366 = vcmp.ge.f32.partialorder %v260, 0.0
    %vm367 = vcmp.ge.f32.partialorder %v265, 0.0
    %vm368 = vcmp.ge.f32.partialorder %v268, 0.0
    %vm369 = vcmp.ge.f32.partialorder %v273, 0.0
    %vm370 = vcmp.ge.f32.partialorder %v276, 0.0
    %vm371 = vcmp.ge.f32.partialorder %v281, 0.0
    %vm372 = vcmp.ge.f32.partialorder %v284, 0.0
    %vm373 = vcmp.ge.f32.partialorder %v289, 0.0
    %vm374 = vcmp.ge.f32.partialorder %v292, 0.0
    %vm375 = vcmp.ge.f32.partialorder %v297, 0.0
    %vm376 = vcmp.ge.f32.partialorder %v300, 0.0
    %vm377 = vcmp.ge.f32.partialorder %v305, 0.0
    %vm378 = vcmp.ge.f32.partialorder %v308, 0.0
    %vm379 = vcmp.ge.f32.partialorder %v313, 0.0
    %vm380 = vcmp.ge.f32.partialorder %v316, 0.0
    %vm381 = vcmp.ge.f32.partialorder %v321, 0.0
    %vm382 = vcmp.ge.f32.partialorder %v324, 0.0
    %vm383 = vcmp.ge.f32.partialorder %v329, 0.0
    %vm384 = vcmp.ge.f32.partialorder %v332, 0.0
    %vm385 = vcmp.ge.f32.partialorder %v337, 0.0
    %vm386 = vcmp.ge.f32.partialorder %v340, 0.0
    %vm387 = vcmp.ge.f32.partialorder %v345, 0.0
    %vm388 = vcmp.ge.f32.partialorder %v348, 0.0
    %vm389 = vcmp.ge.f32.partialorder %v353, 0.0
    %vm390 = vcmp.ge.f32.partialorder %v356, 0.0
    %v391 = vmul.f32 %v233, 0.1
    %v392 = vmul.f32 %v236, 0.1
    %v393 = vmul.f32 %v241, 0.1
    %v394 = vmul.f32 %v244, 0.1
    %v395 = vmul.f32 %v249, 0.1
    %v396 = vmul.f32 %v252, 0.1
    %v397 = vmul.f32 %v257, 0.1
    %v398 = vmul.f32 %v260, 0.1
    %v399 = vmul.f32 %v265, 0.1
    %v400 = vmul.f32 %v268, 0.1
    %v401 = vmul.f32 %v273, 0.1
    %v402 = vmul.f32 %v276, 0.1
    %v403 = vmul.f32 %v281, 0.1
    %v404 = vmul.f32 %v284, 0.1
    %v405 = vmul.f32 %v289, 0.1
    %v406 = vmul.f32 %v292, 0.1
    %v407 = vmul.f32 %v297, 0.1
    %v408 = vmul.f32 %v300, 0.1
    %v409 = vmul.f32 %v305, 0.1
    %v410 = vmul.f32 %v308, 0.1
    %v411 = vmul.f32 %v313, 0.1
    %v412 = vmul.f32 %v316, 0.1
    %v413 = vmul.f32 %v321, 0.1
    %v414 = vmul.f32 %v324, 0.1
    %v415 = vmul.f32 %v329, 0.1
    %v416 = vmul.f32 %v332, 0.1
    %v417 = vmul.f32 %v337, 0.1
    %v418 = vmul.f32 %v340, 0.1
    %v419 = vmul.f32 %v345, 0.1
    %v420 = vmul.f32 %v348, 0.1
    %v421 = vmul.f32 %v353, 0.1
    %v422 = vmul.f32 %v356, 0.1
    %v423 = vsel %vm359, %v233, %v391
    %v424 = vsel %vm360, %v236, %v392
    %v425 = vsel %vm361, %v241, %v393
    %v426 = vsel %vm362, %v244, %v394
    %v427 = vsel %vm363, %v249, %v395
    %v428 = vsel %vm364, %v252, %v396
    %v429 = vsel %vm365, %v257, %v397
    %v430 = vsel %vm366, %v260, %v398
    %v431 = vsel %vm367, %v265, %v399
    %v432 = vsel %vm368, %v268, %v400
    %v433 = vsel %vm369, %v273, %v401
    %v434 = vsel %vm370, %v276, %v402
    %v435 = vsel %vm371, %v281, %v403
    %v436 = vsel %vm372, %v284, %v404
    %v437 = vsel %vm373, %v289, %v405
    %v438 = vsel %vm374, %v292, %v406
    %v439 = vsel %vm375, %v297, %v407
    %v440 = vsel %vm376, %v300, %v408
    %v441 = vsel %vm377, %v305, %v409
    %v442 = vsel %vm378, %v308, %v410
    %v443 = vsel %vm379, %v313, %v411
    %v444 = vsel %vm380, %v316, %v412
    %v445 = vsel %vm381, %v321, %v413
    %v446 = vsel %vm382, %v324, %v414
    %v447 = vsel %vm383, %v329, %v415
    %v448 = vsel %vm384, %v332, %v416
    %v449 = vsel %vm385, %v337, %v417
    %v450 = vsel %vm386, %v340, %v418
    %v451 = vsel %vm387, %v345, %v419
    %v452 = vsel %vm388, %v348, %v420
    %v453 = vsel %vm389, %v353, %v421
    %v454 = vsel %vm390, %v356, %v422
    %455 = vst [vmem:[#allocation2] sm:$0xff] %v423
    %456 = vst [vmem:[#allocation2 + $0x8] sm:$0xff] %v424
    %457 = vst [vmem:[#allocation2 + $0x10] sm:$0xff] %v425
    %458 = vst [vmem:[#allocation2 + $0x18] sm:$0xff] %v426
    %459 = vst [vmem:[#allocation2 + $0x20] sm:$0xff] %v427
    %460 = vst [vmem:[#allocation2 + $0x28] sm:$0xff] %v428
    %461 = vst [vmem:[#allocation2 + $0x30] sm:$0xff] %v429
    %462 = vst [vmem:[#allocation2 + $0x38] sm:$0xff] %v430
    %463 = vst [vmem:[#allocation2 + $0x40] sm:$0xff] %v431
    %464 = vst [vmem:[#allocation2 + $0x48] sm:$0xff] %v432
    %465 = vst [vmem:[#allocation2 + $0x50] sm:$0xff] %v433
    %466 = vst [vmem:[#allocation2 + $0x58] sm:$0xff] %v434
    %467 = vst [vmem:[#allocation2 + $0x60] sm:$0xff] %v435
    %468 = vst [vmem:[#allocation2 + $0x68] sm:$0xff] %v436
    %469 = vst [vmem:[#allocation2 + $0x70] sm:$0xff] %v437
    %470 = vst [vmem:[#allocation2 + $0x78] sm:$0xff] %v438
    %471 = vst [vmem:[#allocation2 + $0x80] sm:$0xff] %v439
    %472 = vst [vmem:[#allocation2 + $0x88] sm:$0xff] %v440
    %473 = vst [vmem:[#allocation2 + $0x90] sm:$0xff] %v441
    %474 = vst [vmem:[#allocation2 + $0x98] sm:$0xff] %v442
    %475 = vst [vmem:[#allocation2 + $0xa0] sm:$0xff] %v443
    %476 = vst [vmem:[#allocation2 + $0xa8] sm:$0xff] %v444
    %477 = vst [vmem:[#allocation2 + $0xb0] sm:$0xff] %v445
    %478 = vst [vmem:[#allocation2 + $0xb8] sm:$0xff] %v446
    %479 = vst [vmem:[#allocation2 + $0xc0] sm:$0xff] %v447
    %480 = vst [vmem:[#allocation2 + $0xc8] sm:$0xff] %v448
    %481 = vst [vmem:[#allocation2 + $0xd0] sm:$0xff] %v449
    %482 = vst [vmem:[#allocation2 + $0xd8] sm:$0xff] %v450
    %483 = vst [vmem:[#allocation2 + $0xe0] sm:$0xff] %v451
    %484 = vst [vmem:[#allocation2 + $0xe8] sm:$0xff] %v452
    %485 = vst [vmem:[#allocation2 + $0xf0] sm:$0xff] %v453
    %486 = vst [vmem:[#allocation2 + $0xf8] sm:$0xff] %v454
    // Predicated region
    $region14: #{tpu_custom_call.1} parent=1 // pred_check
      _
    $region15: #{tpu_custom_call.1} parent=1 // pred_check_branch
      %488 = sbr.rel (0) target = $region17
    $region16: #{tpu_custom_call.1} parent=1 // pred_region
      %s490 = ssub.s32 4096, 4096
      %491 = vsyncadd [#allocation3], %s490
      %s492 = sshll.u32 [#allocation2], 4
      %s493 = int_to_ptr.vmem [resolvable:$true] %s492
      %498 = dma.vmem_to_hbm [thread:$0]  %s493, 4096, %s3, [#allocation3], 128, 128, 8
    $region17: #{tpu_custom_call.1} parent=1 // pred_fallthru
      _
    // Predicated region
    $region18: #{tpu_custom_call.1} parent=1 // pred_check
      _
    $region19: #{tpu_custom_call.1} parent=1 // pred_check_branch
      %500 = sbr.rel (0) target = $region21
    $region20: #{tpu_custom_call.1} parent=1 // pred_region
      %501 = dma.done [#allocation3], 4096
    $region21: #{tpu_custom_call.1} parent=1 // pred_fallthru
      _
    %502 = vsyncpa [#allocation3], 1

</llo_original>
